<compile_context>
chip_gen: v6e
topology: v6e:2x2x1
jax: 0.10.0
libtpu: 0.0.40
codegen_flags: <defaults>
</compile_context>

<pallas_src>
import functools
import math

import jax
import jax.numpy as jnp
from jax.experimental import pallas as pl
from jax.experimental.pallas import tpu as pltpu


def _rmsnorm_kernel(x_ref, w_ref, o_ref, *, eps, inv_dim):
    # x_ref: (tile_rows, dim) input tile; w_ref: (1, dim) weight row.
    x32 = x_ref[...].astype(jnp.float32)                         # x.float()
    ms = jnp.sum(x32 * x32, axis=-1, keepdims=True) * inv_dim     # pow(2).mean(-1)
    normed = x32 * jax.lax.rsqrt(ms + eps)                        # * rsqrt(.. + eps)
    normed = normed.astype(x_ref.dtype)                           # .type_as(x)
    o_ref[...] = (normed * w_ref[...]).astype(o_ref.dtype)        # * self.weight


def _vmem_capacity_bytes():
    try:
        return int(pltpu.get_tpu_info().vmem_capacity_bytes)
    except Exception:
        # Conservative fallback: smallest physical per-TC VMEM (v7x = 64 MiB).
        return 64 * 1024 * 1024


def _round_down(v, m):
    return (v // m) * m


def _auto_tile_rows(rows, dim, in_dtype, out_dtype, sublane):
    """Largest sublane-aligned row tile that fits the VMEM budget, with
    enough grid steps for megacore sharding + pipeline overlap."""
    cap = _vmem_capacity_bytes()
    # Leave headroom below physical VMEM for the compiler's own scratch.
    vmem_limit = min(cap * 3 // 4, 96 * 1024 * 1024)
    tile_budget = vmem_limit * 3 // 4

    in_bytes = jnp.dtype(in_dtype).itemsize
    out_bytes = jnp.dtype(out_dtype).itemsize
    # Per-row VMEM cost:
    #   2x double-buffered input tile + 2x double-buffered output tile
    #   + ~2 tile-sized f32 intermediates (x32, normed) inside the body.
    bytes_per_row = dim * (2 * (in_bytes + out_bytes) + 2 * 4)
    max_rows = max(sublane, tile_budget // max(1, bytes_per_row))

    # 512 rows is already ~85% of HBM roofline; cap at 256 on small-VMEM
    # chips (v7x: 64 MiB per TC) which also have ~2.3x the HBM bandwidth.
    row_cap = 256 if cap <= 64 * 1024 * 1024 else 512
    tile = min(int(max_rows), row_cap)
    tile = max(sublane, _round_down(tile, sublane))

    rows_rounded = -(-rows // sublane) * sublane
    tile = min(tile, rows_rounded)

    # Target >= 8 grid steps when rows allow (>= 4 per TensorCore on v7x),
    # so megacore sharding still leaves steady-state double-buffering.
    min_steps = 8
    steps_tile = _round_down(rows_rounded // min_steps, sublane)
    if steps_tile >= sublane:
        tile = min(tile, steps_tile)

    return tile, vmem_limit


def rmsnorm(x, weight, eps=1e-6, tile_rows=None, out_dtype=None):
    """RMSNorm over the last axis. x: (..., dim), weight: (dim,).

    out_dtype defaults to promote_types(x.dtype, weight.dtype), matching the
    PyTorch module (`.type_as(x) * self.weight`).  Pass out_dtype=x.dtype (or
    cast the weight to x.dtype) to halve HBM writeback on bf16 activations.
    """
    orig_shape = x.shape
    dim = orig_shape[-1]
    rows = int(math.prod(orig_shape[:-1])) if len(orig_shape) > 1 else 1
    x2d = x.reshape(rows, dim)
    w2d = weight.reshape(1, dim)

    if out_dtype is None:
        out_dtype = jnp.promote_types(x.dtype, weight.dtype)

    # Sublane packing of the input dtype: 8 rows (32-bit), 16 (16-bit), 32 (8-bit).
    packing = max(1, 4 // jnp.dtype(x.dtype).itemsize)
    sublane = 8 * packing

    auto_tile, vmem_limit = _auto_tile_rows(rows, dim, x.dtype, out_dtype, sublane)
    if tile_rows is None:
        tile_rows = auto_tile
    else:
        # Sublane-align and clamp user-supplied tiles so the (8,128) block
        # constraint always holds (unless the tile is the full row count).
        tile_rows = max(sublane, int(tile_rows))
        if tile_rows != rows:
            tile_rows = max(sublane, -(-tile_rows // sublane) * sublane)
        tile_rows = min(tile_rows, max(sublane, -(-rows // sublane) * sublane))

    grid = (pl.cdiv(rows, tile_rows),)

    kernel = functools.partial(_rmsnorm_kernel, eps=float(eps), inv_dim=1.0 / dim)

    # TODO(synk): on v7x, if per-step DMA is still exposed with 256-row tiles,
    # try pipeline_mode=pl.Buffered(3) on the input/output BlockSpecs.
    out = pl.pallas_call(
        kernel,
        out_shape=jax.ShapeDtypeStruct((rows, dim), out_dtype),
        grid_spec=pltpu.PrefetchScalarGridSpec(
            num_scalar_prefetch=0,
            grid=grid,
            in_specs=[
                pl.BlockSpec((tile_rows, dim), lambda i: (i, 0)),
                pl.BlockSpec((1, dim), lambda i: (0, 0)),
            ],
            out_specs=pl.BlockSpec((tile_rows, dim), lambda i: (i, 0)),
        ),
        compiler_params=pltpu.CompilerParams(
            dimension_semantics=("parallel",),
            vmem_limit_bytes=int(vmem_limit),
        ),
    )(x2d, w2d)

    return out.reshape(orig_shape[:-1] + (dim,)).astype(out_dtype).reshape(
        orig_shape[:-1] + (dim,))


def rmsnorm_ref(x, weight, eps=1e-6):
    x32 = x.astype(jnp.float32)
    normed = x32 * jax.lax.rsqrt(jnp.mean(x32 * x32, axis=-1, keepdims=True) + eps)
    return normed.astype(x.dtype) * weight


if __name__ == "__main__":
    key = jax.random.PRNGKey(0)

    # Test 1: shapes matching the module spec (nn.Parameter(torch.ones(dim))).
    batch, seq, dim = 2, 8, 32
    x = jax.random.normal(key, (batch, seq, dim), dtype=jnp.float32)
    weight = jnp.ones((dim,), dtype=jnp.float32)

    out = jax.block_until_ready(rmsnorm(x, weight))
    ref = rmsnorm_ref(x, weight)
    assert out.shape == x.shape, (out.shape, x.shape)
    assert jnp.allclose(out, ref, atol=1e-5, rtol=1e-5), "f32 mismatch vs reference"

    # Test 2: rows not divisible by the tile / sublane (exercises cdiv + masked
    # edge block) with a lane-dense dim and non-trivial weight.
    k1, k2 = jax.random.split(key)
    x2 = jax.random.normal(k1, (2, 9, 128), dtype=jnp.float32)
    w2 = jax.random.normal(k2, (128,), dtype=jnp.float32)
    out2 = jax.block_until_ready(rmsnorm(x2, w2))
    ref2 = rmsnorm_ref(x2, w2)
    assert jnp.allclose(out2, ref2, atol=1e-5, rtol=1e-5), "edge-block mismatch"

    # Test 3: bf16 activations/weights (sublane packing = 16 rows).
    x3 = jax.random.normal(k1, (2, 16, 128), dtype=jnp.bfloat16)
    w3 = jnp.ones((128,), dtype=jnp.bfloat16)
    out3 = jax.block_until_ready(rmsnorm(x3, w3))
    ref3 = rmsnorm_ref(x3, w3)
    assert jnp.allclose(out3.astype(jnp.float32), ref3.astype(jnp.float32),
                        atol=2e-2, rtol=2e-2), "bf16 mismatch"

    # Test 4: user-supplied tile_rows that is not a sublane multiple (must be
    # auto-aligned, not fail lowering).
    out4 = jax.block_until_ready(rmsnorm(x2, w2, tile_rows=5))
    assert jnp.allclose(out4, ref2, atol=1e-5, rtol=1e-5), "tile_rows clamp mismatch"

    print("KERNEL_OK")
</pallas_src>

<mosaic_0001>
module attributes {stable_mosaic.version = 11 : i64} {
  func.func @_rmsnorm_kernel(%arg0: i32, %arg1: memref<16x32xf32, #tpu.memory_space<vmem>>, %arg2: memref<1x32xf32, #tpu.memory_space<vmem>>, %arg3: memref<16x32xf32, #tpu.memory_space<vmem>>) attributes {dimension_semantics = [#tpu.dimension_semantics<parallel>], iteration_bounds = array<i64: 1>, scalar_prefetch = 0 : i64, scratch_operands = 0 : i64, tpu.core_type = #tpu.core_type<tc>, window_params = [{transform_indices = @transform_0, window_bounds = array<i64: 16, 32>}, {pipeline_mode = #tpu.pipeline_mode<synchronous>, transform_indices = @transform_1, window_bounds = array<i64: 1, 32>}, {transform_indices = @transform_2, window_bounds = array<i64: 16, 32>}]} {
    %c0 = arith.constant 0 : index
    %c0_0 = arith.constant 0 : index
    %0 = vector.load %arg1[%c0, %c0_0] : memref<16x32xf32, #tpu.memory_space<vmem>>, vector<16x32xf32>
    %1 = arith.mulf %0, %0 : vector<16x32xf32>
    %cst = arith.constant dense<0.000000e+00> : vector<16xf32>
    %2 = vector.multi_reduction <add>, %1, %cst [1] : vector<16x32xf32> to vector<16xf32>
    %3 = vector.shape_cast %2 : vector<16xf32> to vector<16x1xf32>
    %cst_1 = arith.constant 3.125000e-02 : f32
    %4 = vector.broadcast %cst_1 : f32 to vector<16x1xf32>
    %5 = arith.mulf %3, %4 : vector<16x1xf32>
    %cst_2 = arith.constant 9.99999997E-7 : f32
    %6 = vector.broadcast %cst_2 : f32 to vector<16x1xf32>
    %7 = arith.addf %5, %6 : vector<16x1xf32>
    %8 = math.rsqrt %7 : vector<16x1xf32>
    %9 = vector.broadcast %8 : vector<16x1xf32> to vector<16x32xf32>
    %10 = arith.mulf %0, %9 : vector<16x32xf32>
    %c0_3 = arith.constant 0 : index
    %c0_4 = arith.constant 0 : index
    %11 = vector.load %arg2[%c0_3, %c0_4] : memref<1x32xf32, #tpu.memory_space<vmem>>, vector<1x32xf32>
    %12 = vector.broadcast %11 : vector<1x32xf32> to vector<16x32xf32>
    %13 = arith.mulf %10, %12 : vector<16x32xf32>
    %c0_5 = arith.constant 0 : index
    %c0_6 = arith.constant 0 : index
    %14 = vector.load %arg3[%c0_5, %c0_6] : memref<16x32xf32, #tpu.memory_space<vmem>>, vector<16x32xf32>
    tpu.vector_store %arg3[%c0_5, %c0_6], %13 {strides = array<i32>} : memref<16x32xf32, #tpu.memory_space<vmem>>, vector<16x32xf32>,
    return
  }
  func.func @transform_0(%arg0: i32) -> (i32, i32) {
    %c0_i32 = arith.constant 0 : i32
    %c0_i32_0 = arith.constant 0 : i32
    return %arg0, %c0_i32 : i32, i32
  }
  func.func @transform_1(%arg0: i32) -> (i32, i32) {
    %c0_i32 = arith.constant 0 : i32
    %c0_i32_0 = arith.constant 0 : i32
    %c0_i32_1 = arith.constant 0 : i32
    return %c0_i32, %c0_i32_0 : i32, i32
  }
  func.func @transform_2(%arg0: i32) -> (i32, i32) {
    %c0_i32 = arith.constant 0 : i32
    %c0_i32_0 = arith.constant 0 : i32
    return %arg0, %c0_i32 : i32, i32
  }
}

</mosaic_0001>

<llo_original>
// kernel: tpu_custom_call.1
$region0: #{tpu_custom_call.1}
  #allocation0 [shape = 'u32[]', space=smem, size = 0x4, offset = 0x4, fixed_abs, tag = 'smem constant byte address 0x4 - core index']
  #allocation1 [shape = 'u32[144,128]{1,0:T(1,128)}', space=vmem, size = 0x12000, scoped, tag = 'internal scratch']
  %s0 = inlined_call_operand.hbm [shape: f32[16,32], index: 0, kind: input, shape index: {}]
  %s1 = inlined_call_operand.vmem [shape: f32[1,32], index: 1, kind: input, shape index: {}]
  %s2 = inlined_call_operand.hbm [shape: f32[16,32], index: 2, kind: output, shape index: {}]
  %s3 = sld [smem:[#allocation0]]
  $region22: #{tpu_custom_call.1} parent=0
    _
  %s5 = ssub.s32 1, %s3
  %s6 = scalar_select 0, %s5, %s3
  $region1: #{tpu_custom_call.1} parent=0
    #allocation2 [shape = 'u8[8192]{0}', space=vmem, size = 0x2000, scoped, tag = 'input window, operand 0, single buffered']
    #allocation3 [shape = 's32[1]{0}', space=sflag, size = 0x4, scoped, tag = 'scoped memory for tpu_custom_call.1']
    #allocation4 [shape = 's32[1]{0}', space=sflag, size = 0x4, scoped, tag = 'scoped memory for tpu_custom_call.1']
    #allocation5 [shape = 'u8[8192]{0}', space=vmem, size = 0x2000, scoped, tag = 'output window, operand 0, single buffered']
    %7 = vsyncpa [#allocation3], 0
    %8 = vsyncpa [#allocation4], 0
    // Predicated region
    $region2: #{tpu_custom_call.1} parent=1 // pred_check
      _
    $region3: #{tpu_custom_call.1} parent=1 // pred_check_branch
      %10 = sbr.rel (0) target = $region5
    $region4: #{tpu_custom_call.1} parent=1 // pred_region
      %s12 = ssub.s32 256, 256
      %13 = vsyncadd [#allocation3], %s12
      %s14 = sshll.u32 [#allocation2], 4
      %s15 = int_to_ptr.vmem [resolvable:$true] %s14
      %20 = dma.hbm_to_vmem [thread:$0]  %s0, 256, %s15, [#allocation3], 128, 128, 8
    $region5: #{tpu_custom_call.1} parent=1 // pred_fallthru
      _
    // Predicated region
    $region6: #{tpu_custom_call.1} parent=1 // pred_check
      _
    $region7: #{tpu_custom_call.1} parent=1 // pred_check_branch
      %22 = sbr.rel (0) target = $region9
    $region8: #{tpu_custom_call.1} parent=1 // pred_region
      _
    $region9: #{tpu_custom_call.1} parent=1 // pred_fallthru
      _
    // Predicated region
    $region10: #{tpu_custom_call.1} parent=1 // pred_check
      _
    $region11: #{tpu_custom_call.1} parent=1 // pred_check_branch
      %24 = sbr.rel (0) target = $region13
    $region12: #{tpu_custom_call.1} parent=1 // pred_region
      %25 = dma.done [#allocation3], 256
    $region13: #{tpu_custom_call.1} parent=1 // pred_fallthru
      _
    %v26 = vld [vmem:[#allocation2] sm:$0xff]
    %v27 = vld [vmem:[#allocation2 + $0x8] sm:$0xff]
    %v28 = vmul.f32 %v26, %v26
    %v29 = vmul.f32 %v27, %v27
    %vm30 = vcmask 261120
    %v31 = vsel %vm30, %v28, 0.0
    %32 = vadd.xlane.f32.xlu0 %v31
    %v33 = vpop.xlane.xlu0 %32
    %v34 = vsel %vm30, %v29, 0.0
    %35 = vadd.xlane.f32.xlu0 %v34
    %v36 = vpop.xlane.xlu0 %35
    %v37 = vmul.f32 %v33, 0.03125
    %v38 = vmul.f32 %v36, 0.03125
    %v39 = vadd.f32 %v37, 1e-06
    %v40 = vadd.f32 %v38, 1e-06
    %v41 = vrsqrt.pop %v39
    %v42 = vrsqrt.pop %v40
    %v43 = vmul.f32 %v26, %v41
    %v44 = vmul.f32 %v27, %v42
    %v45 = vld [vmem:[%s1] sm:$0x1]
    %v47 = vlaneseq
    %v48 = vshrl.u32 %v47, 7
    %v49 = vsub.s32 0, %v48
    %v50 = vrot.slane %v45, %v49
    %v52 = vmul.f32 %v43, %v50
    %v53 = vmul.f32 %v44, %v50
    %54 = vst.msk [vmem:[#allocation5] sm:$0xff] %vm30, %v52
    %55 = vst.msk [vmem:[#allocation5 + $0x8] sm:$0xff] %vm30, %v53
    // Predicated region
    $region14: #{tpu_custom_call.1} parent=1 // pred_check
      _
    $region15: #{tpu_custom_call.1} parent=1 // pred_check_branch
      %57 = sbr.rel (0) target = $region17
    $region16: #{tpu_custom_call.1} parent=1 // pred_region
      %s59 = ssub.s32 256, 256
      %60 = vsyncadd [#allocation4], %s59
      %s61 = sshll.u32 [#allocation5], 4
      %s62 = int_to_ptr.vmem [resolvable:$true] %s61
      %67 = dma.vmem_to_hbm [thread:$0]  %s62, 256, %s2, [#allocation4], 128, 128, 8
    $region17: #{tpu_custom_call.1} parent=1 // pred_fallthru
      _
    // Predicated region
    $region18: #{tpu_custom_call.1} parent=1 // pred_check
      _
    $region19: #{tpu_custom_call.1} parent=1 // pred_check_branch
      %69 = sbr.rel (0) target = $region21
    $region20: #{tpu_custom_call.1} parent=1 // pred_region
      %70 = dma.done [#allocation4], 256
    $region21: #{tpu_custom_call.1} parent=1 // pred_fallthru
      _
    %71 = vsyncpa [#allocation3], 1
    %72 = vsyncpa [#allocation4], 1

</llo_original>
